<compile_context>
chip_gen: v7x
topology: tpu7x:2x2x1
jax: 0.10.0
libtpu: 0.0.40
codegen_flags: <defaults>
</compile_context>

<pallas_src>
import math

import jax
import jax.numpy as jnp
from jax.experimental import pallas as pl
from jax.experimental.pallas import tpu as pltpu


def _round_up(n: int, m: int) -> int:
    return ((n + m - 1) // m) * m


def _condflow_kernel(xy_ref, z_ref, w1a_ref, w1z_ref, b1_ref, w2_ref, b2_ref,
                     out_ref, logdet_ref):
    """Fused CondFlow forward for one batch tile.

    xy/z: (TILE_B, dim_xy / d_z).
    w1a/w1z/b1: first-layer weights of scale+shift nets, all layers, stacked
                along the output axis ([s_0..s_{L-1} | t_0..t_{L-1}] blocks of
                width `hidden`); xa-rows / z-rows pre-split (concat fused away).
    w2/b2:      block-diagonal second-layer weights with matching block order,
                output blocks of width dim_b.
    """
    dim_a = w1a_ref.shape[0]
    dim_b = out_ref.shape[-1] - dim_a
    half = w2_ref.shape[-1] // 2           # == n_layers * dim_b
    n_layers = half // dim_b

    xa = xy_ref[:, :dim_a]                 # passes through every layer unchanged
    xb = xy_ref[:, dim_a:].astype(jnp.float32)
    z = z_ref[...]

    # (1) All first-layer GEMMs hoisted into one lane-dense matmul pair.
    h1 = (jnp.dot(xa, w1a_ref[...], preferred_element_type=jnp.float32)
          + jnp.dot(z, w1z_ref[...], preferred_element_type=jnp.float32)
          + b1_ref[...])
    h1 = jnp.maximum(h1, 0.0)              # (TILE_B, 2*L*hidden)

    # (2) All second-layer GEMMs fused into one block-diagonal matmul.
    st = (jnp.dot(h1.astype(w2_ref.dtype), w2_ref[...],
                  preferred_element_type=jnp.float32) + b2_ref[...])
    s_all = jnp.tanh(st[:, :half])         # [s_0 | ... | s_{L-1}]
    t_all = st[:, half:]                   # [t_0 | ... | t_{L-1}]

    # (3) Sequential part of the flow: tiny f32 elementwise chain on xb only.
    #     (n_layers is small & static; live state is just one (TILE_B, dim_b)
    #     accumulator, so a Python unroll is fine.)
    for l in range(n_layers):
        s_l = s_all[:, l * dim_b:(l + 1) * dim_b]
        t_l = t_all[:, l * dim_b:(l + 1) * dim_b]
        xb = xb * jnp.exp(s_l) + t_l

    # (4) Full-width concatenated output emitted directly from the kernel.
    out_ref[:, :dim_a] = xa.astype(out_ref.dtype)
    out_ref[:, dim_a:] = xb.astype(out_ref.dtype)
    # (5) logdet = sum_l sum(s_l) -> one cross-lane reduction over all s lanes.
    logdet_ref[...] = jnp.sum(s_all, axis=-1, keepdims=True).astype(logdet_ref.dtype)


@jax.jit
def condflow_forward(xy, z, W1s, b1s, W2s, b2s, W1t, b1t, W2t, b2t):
    """CondFlow.forward: xy (B, dim_xy), z (B, d_z) -> (out (B, dim_xy), logdet (B,))."""
    B, dim = xy.shape
    dim_a = dim - dim // 2
    dim_b = dim // 2
    d_z = z.shape[-1]
    L, d_in, hidden = W1s.shape

    # ---- trace-time weight restructuring (tiny; fused by XLA) --------------
    # First-layer weights of both nets / all layers stacked along the output
    # axis; xa-rows and z-rows split so concat([xa, z]) never materialises.
    W1_all = jnp.concatenate(
        [jnp.transpose(W1s, (1, 0, 2)).reshape(d_in, L * hidden),
         jnp.transpose(W1t, (1, 0, 2)).reshape(d_in, L * hidden)], axis=-1)
    W1a_all = W1_all[:dim_a]                                  # (dim_a, 2*L*hidden)
    W1z_all = W1_all[dim_a:]                                  # (d_z,   2*L*hidden)
    b1_all = jnp.concatenate([b1s.reshape(-1), b1t.reshape(-1)]
                             ).reshape(1, 2 * L * hidden)

    # Second-layer weights as one block-diagonal matrix in matching block order.
    blocks = [W2s[l] for l in range(L)] + [W2t[l] for l in range(L)]
    W2_bd = jnp.zeros((2 * L * hidden, 2 * L * dim_b), W2s.dtype)
    for i, blk in enumerate(blocks):
        W2_bd = W2_bd.at[i * hidden:(i + 1) * hidden,
                         i * dim_b:(i + 1) * dim_b].set(blk)
    b2_all = jnp.concatenate([b2s.reshape(-1), b2t.reshape(-1)]
                             ).reshape(1, 2 * L * dim_b)

    # ---- batch tiling: pad-free (Pallas masks the trailing partial block).
    # >=2 grid steps when B allows, so the "parallel" batch axis actually
    # shards across both TensorCores on v7x; tiles up to 1024 rows (per-tile
    # VMEM is KBs of activations + the small weight stack).
    MAX_TILE_B = 1024
    if B <= 8:
        tile_b = _round_up(max(B, 1), 8)
    else:
        n_tiles = max(2, pl.cdiv(B, MAX_TILE_B))
        tile_b = _round_up(pl.cdiv(B, n_tiles), 8)
    grid = (pl.cdiv(B, tile_b),)

    def batch_spec(feat):
        return pl.BlockSpec((tile_b, feat), lambda i: (i, 0))

    def const_spec(arr):
        # Full-array block pinned to (0, 0): fetched once, VMEM-resident
        # across all grid steps.
        return pl.BlockSpec(arr.shape, lambda i: (0, 0))

    out, logdet2d = pl.pallas_call(
        _condflow_kernel,
        out_shape=(jax.ShapeDtypeStruct((B, dim), xy.dtype),
                   jax.ShapeDtypeStruct((B, 1), jnp.float32)),
        grid=grid,
        in_specs=[
            batch_spec(dim), batch_spec(d_z),
            const_spec(W1a_all), const_spec(W1z_all), const_spec(b1_all),
            const_spec(W2_bd), const_spec(b2_all),
        ],
        out_specs=(batch_spec(dim), batch_spec(1)),
        compiler_params=pltpu.CompilerParams(
            # Batch tiles are independent -> shard across both TCs on v7x.
            dimension_semantics=("parallel",)),
    )(xy, z, W1a_all, W1z_all, b1_all, W2_bd, b2_all)

    return out, logdet2d[:, 0]


def init_condflow_params(key, dim_xy, d_z, hidden, n_layers, dtype=jnp.float32):
    """nn.Linear-style uniform init; weights kept math-layout [in, out], stacked over layers."""
    dim_a = dim_xy - dim_xy // 2
    dim_b = dim_xy // 2
    d_in = dim_a + d_z

    def uni(k, fan_in, shape):
        lim = 1.0 / math.sqrt(fan_in)
        return jax.random.uniform(k, shape, dtype, -lim, lim)

    ks = jax.random.split(key, 8)
    W1s = uni(ks[0], d_in, (n_layers, d_in, hidden))
    b1s = uni(ks[1], d_in, (n_layers, hidden))
    W2s = uni(ks[2], hidden, (n_layers, hidden, dim_b))
    b2s = uni(ks[3], hidden, (n_layers, dim_b))
    W1t = uni(ks[4], d_in, (n_layers, d_in, hidden))
    b1t = uni(ks[5], d_in, (n_layers, hidden))
    W2t = uni(ks[6], hidden, (n_layers, hidden, dim_b))
    b2t = uni(ks[7], hidden, (n_layers, dim_b))
    return W1s, b1s, W2s, b2s, W1t, b1t, W2t, b2t


def condflow_reference(xy, z, W1s, b1s, W2s, b2s, W1t, b1t, W2t, b2t):
    """Pure-JAX transcription of the PyTorch CondFlow.forward (layer-by-layer)."""
    dim = xy.shape[-1]
    dim_a = dim - dim // 2
    n_layers = W1s.shape[0]
    h = xy
    logdet = 0.0
    for l in range(n_layers):
        xa, xb = h[:, :dim_a], h[:, dim_a:]
        hin = jnp.concatenate([xa, z], axis=-1)
        a1 = jnp.maximum(hin @ W1s[l] + b1s[l], 0.0)
        s = jnp.tanh(a1 @ W2s[l] + b2s[l])
        a2 = jnp.maximum(hin @ W1t[l] + b1t[l], 0.0)
        t = a2 @ W2t[l] + b2t[l]
        xb = xb * jnp.exp(s) + t
        logdet = logdet + s.sum(-1)
        h = jnp.concatenate([xa, xb], axis=-1)
    return h, logdet


if __name__ == "__main__":
    # Small shapes consistent with the module: xy features, latent z, 4 couplings.
    batch, dim_xy, d_z, hidden, n_layers = 8, 6, 4, 32, 4

    key = jax.random.PRNGKey(0)
    kxy, kz, kp = jax.random.split(key, 3)
    xy = jax.random.normal(kxy, (batch, dim_xy), jnp.float32)
    z = jax.random.normal(kz, (batch, d_z), jnp.float32)
    params = init_condflow_params(kp, dim_xy, d_z, hidden, n_layers)

    out, logdet = condflow_forward(xy, z, *params)
    jax.block_until_ready((out, logdet))

    out_ref, logdet_ref = condflow_reference(xy, z, *params)
    assert out.shape == (batch, dim_xy)
    assert logdet.shape == (batch,)
    assert jnp.allclose(out, out_ref, atol=1e-5, rtol=1e-5)
    assert jnp.allclose(logdet, logdet_ref, atol=1e-5, rtol=1e-5)

    # Ragged, multi-tile batch: exercises the pad-free grid (2 "parallel"
    # steps + masked trailing partial block) used for v7x megacore sharding.
    batch2 = 13
    xy2 = jax.random.normal(jax.random.PRNGKey(1), (batch2, dim_xy), jnp.float32)
    z2 = jax.random.normal(jax.random.PRNGKey(2), (batch2, d_z), jnp.float32)
    out2, logdet2 = condflow_forward(xy2, z2, *params)
    jax.block_until_ready((out2, logdet2))
    out2_ref, logdet2_ref = condflow_reference(xy2, z2, *params)
    assert jnp.allclose(out2, out2_ref, atol=1e-5, rtol=1e-5)
    assert jnp.allclose(logdet2, logdet2_ref, atol=1e-5, rtol=1e-5)

    # TODO(synk): CondFlow.inverse (reverse coupling pass) not implemented; spec is forward only.
    # TODO(synk): optional bf16 streaming of xy/z/weights (f32 accumulate) kept off to
    # preserve the f32 reference tolerance; flip dtypes at the pallas_call boundary if desired.
    print("KERNEL_OK")
</pallas_src>

<mosaic_0001>
module attributes {stable_mosaic.version = 11 : i64} {
  func.func @_condflow_kernel(%arg0: i32, %arg1: memref<8x6xf32, #tpu.memory_space<vmem>>, %arg2: memref<8x4xf32, #tpu.memory_space<vmem>>, %arg3: memref<3x256xf32, #tpu.memory_space<vmem>>, %arg4: memref<4x256xf32, #tpu.memory_space<vmem>>, %arg5: memref<1x256xf32, #tpu.memory_space<vmem>>, %arg6: memref<256x24xf32, #tpu.memory_space<vmem>>, %arg7: memref<1x24xf32, #tpu.memory_space<vmem>>, %arg8: memref<8x6xf32, #tpu.memory_space<vmem>>, %arg9: memref<8x1xf32, #tpu.memory_space<vmem>>) attributes {dimension_semantics = [#tpu.dimension_semantics<parallel>], iteration_bounds = array<i64: 1>, scalar_prefetch = 0 : i64, scratch_operands = 0 : i64, tpu.core_type = #tpu.core_type<tc>, window_params = [{transform_indices = @transform_0, window_bounds = array<i64: 8, 6>}, {transform_indices = @transform_1, window_bounds = array<i64: 8, 4>}, {pipeline_mode = #tpu.pipeline_mode<synchronous>, transform_indices = @transform_2, window_bounds = array<i64: 3, 256>}, {pipeline_mode = #tpu.pipeline_mode<synchronous>, transform_indices = @transform_3, window_bounds = array<i64: 4, 256>}, {pipeline_mode = #tpu.pipeline_mode<synchronous>, transform_indices = @transform_4, window_bounds = array<i64: 1, 256>}, {pipeline_mode = #tpu.pipeline_mode<synchronous>, transform_indices = @transform_5, window_bounds = array<i64: 256, 24>}, {pipeline_mode = #tpu.pipeline_mode<synchronous>, transform_indices = @transform_6, window_bounds = array<i64: 1, 24>}, {transform_indices = @transform_7, window_bounds = array<i64: 8, 6>}, {transform_indices = @transform_8, window_bounds = array<i64: 8, 1>}]} {
    %c0 = arith.constant 0 : index
    %c0_0 = arith.constant 0 : index
    %0 = vector.load %arg1[%c0, %c0_0] : memref<8x6xf32, #tpu.memory_space<vmem>>, vector<8x3xf32>
    %c0_1 = arith.constant 0 : index
    %c3 = arith.constant 3 : index
    %1 = vector.load %arg1[%c0_1, %c3] : memref<8x6xf32, #tpu.memory_space<vmem>>, vector<8x3xf32>
    %c0_2 = arith.constant 0 : index
    %c0_3 = arith.constant 0 : index
    %2 = vector.load %arg2[%c0_2, %c0_3] : memref<8x4xf32, #tpu.memory_space<vmem>>, vector<8x4xf32>
    %c0_4 = arith.constant 0 : index
    %c0_5 = arith.constant 0 : index
    %3 = vector.load %arg3[%c0_4, %c0_5] : memref<3x256xf32, #tpu.memory_space<vmem>>, vector<3x256xf32>
    %cst = arith.constant dense<0.000000e+00> : vector<8x256xf32>
    %4 = tpu.matmul %0, %3, %cst {dimension_numbers = #tpu.dot_dimension_numbers<[1], [0], [0], [1], [0, 0, 1, 1], [], []>} : vector<8x3xf32>, vector<3x256xf32>, vector<8x256xf32> -> vector<8x256xf32>
    %c0_6 = arith.constant 0 : index
    %c0_7 = arith.constant 0 : index
    %5 = vector.load %arg4[%c0_6, %c0_7] : memref<4x256xf32, #tpu.memory_space<vmem>>, vector<4x256xf32>
    %cst_8 = arith.constant dense<0.000000e+00> : vector<8x256xf32>
    %6 = tpu.matmul %2, %5, %cst_8 {dimension_numbers = #tpu.dot_dimension_numbers<[1], [0], [0], [1], [0, 0, 1, 1], [], []>} : vector<8x4xf32>, vector<4x256xf32>, vector<8x256xf32> -> vector<8x256xf32>
    %7 = arith.addf %4, %6 : vector<8x256xf32>
    %c0_9 = arith.constant 0 : index
    %c0_10 = arith.constant 0 : index
    %8 = vector.load %arg5[%c0_9, %c0_10] : memref<1x256xf32, #tpu.memory_space<vmem>>, vector<1x256xf32>
    %9 = vector.broadcast %8 : vector<1x256xf32> to vector<8x256xf32>
    %10 = arith.addf %7, %9 : vector<8x256xf32>
    %cst_11 = arith.constant 0.000000e+00 : f32
    %11 = vector.broadcast %cst_11 : f32 to vector<8x256xf32>
    %12 = arith.maximumf %10, %11 : vector<8x256xf32>
    %c0_12 = arith.constant 0 : index
    %c0_13 = arith.constant 0 : index
    %13 = vector.load %arg6[%c0_12, %c0_13] : memref<256x24xf32, #tpu.memory_space<vmem>>, vector<256x24xf32>
    %cst_14 = arith.constant dense<0.000000e+00> : vector<8x24xf32>
    %14 = tpu.matmul %12, %13, %cst_14 {dimension_numbers = #tpu.dot_dimension_numbers<[1], [0], [0], [1], [0, 0, 1, 1], [], []>} : vector<8x256xf32>, vector<256x24xf32>, vector<8x24xf32> -> vector<8x24xf32>
    %c0_15 = arith.constant 0 : index
    %c0_16 = arith.constant 0 : index
    %15 = vector.load %arg7[%c0_15, %c0_16] : memref<1x24xf32, #tpu.memory_space<vmem>>, vector<1x24xf32>
    %16 = vector.broadcast %15 : vector<1x24xf32> to vector<8x24xf32>
    %17 = arith.addf %14, %16 : vector<8x24xf32>
    %18 = vector.extract_strided_slice %17 {offsets = [0, 0], sizes = [8, 12], strides = [1, 1]} : vector<8x24xf32> to vector<8x12xf32>
    %19 = math.tanh %18 : vector<8x12xf32>
    %20 = vector.extract_strided_slice %17 {offsets = [0, 12], sizes = [8, 12], strides = [1, 1]} : vector<8x24xf32> to vector<8x12xf32>
    %21 = vector.extract_strided_slice %19 {offsets = [0, 0], sizes = [8, 3], strides = [1, 1]} : vector<8x12xf32> to vector<8x3xf32>
    %22 = vector.extract_strided_slice %20 {offsets = [0, 0], sizes = [8, 3], strides = [1, 1]} : vector<8x12xf32> to vector<8x3xf32>
    %23 = math.exp %21 : vector<8x3xf32>
    %24 = arith.mulf %1, %23 : vector<8x3xf32>
    %25 = arith.addf %24, %22 : vector<8x3xf32>
    %26 = vector.extract_strided_slice %19 {offsets = [0, 3], sizes = [8, 3], strides = [1, 1]} : vector<8x12xf32> to vector<8x3xf32>
    %27 = vector.extract_strided_slice %20 {offsets = [0, 3], sizes = [8, 3], strides = [1, 1]} : vector<8x12xf32> to vector<8x3xf32>
    %28 = math.exp %26 : vector<8x3xf32>
    %29 = arith.mulf %25, %28 : vector<8x3xf32>
    %30 = arith.addf %29, %27 : vector<8x3xf32>
    %31 = vector.extract_strided_slice %19 {offsets = [0, 6], sizes = [8, 3], strides = [1, 1]} : vector<8x12xf32> to vector<8x3xf32>
    %32 = vector.extract_strided_slice %20 {offsets = [0, 6], sizes = [8, 3], strides = [1, 1]} : vector<8x12xf32> to vector<8x3xf32>
    %33 = math.exp %31 : vector<8x3xf32>
    %34 = arith.mulf %30, %33 : vector<8x3xf32>
    %35 = arith.addf %34, %32 : vector<8x3xf32>
    %36 = vector.extract_strided_slice %19 {offsets = [0, 9], sizes = [8, 3], strides = [1, 1]} : vector<8x12xf32> to vector<8x3xf32>
    %37 = vector.extract_strided_slice %20 {offsets = [0, 9], sizes = [8, 3], strides = [1, 1]} : vector<8x12xf32> to vector<8x3xf32>
    %38 = math.exp %36 : vector<8x3xf32>
    %39 = arith.mulf %35, %38 : vector<8x3xf32>
    %40 = arith.addf %39, %37 : vector<8x3xf32>
    %c0_17 = arith.constant 0 : index
    %c0_18 = arith.constant 0 : index
    %41 = vector.load %arg8[%c0_17, %c0_18] : memref<8x6xf32, #tpu.memory_space<vmem>>, vector<8x3xf32>
    tpu.vector_store %arg8[%c0_17, %c0_18], %0 {strides = array<i32>} : memref<8x6xf32, #tpu.memory_space<vmem>>, vector<8x3xf32>,
    %c0_19 = arith.constant 0 : index
    %c3_20 = arith.constant 3 : index
    %42 = vector.load %arg8[%c0_19, %c3_20] : memref<8x6xf32, #tpu.memory_space<vmem>>, vector<8x3xf32>
    tpu.vector_store %arg8[%c0_19, %c3_20], %40 {strides = array<i32>} : memref<8x6xf32, #tpu.memory_space<vmem>>, vector<8x3xf32>,
    %cst_21 = arith.constant dense<0.000000e+00> : vector<8xf32>
    %43 = vector.multi_reduction <add>, %19, %cst_21 [1] : vector<8x12xf32> to vector<8xf32>
    %44 = vector.shape_cast %43 : vector<8xf32> to vector<8x1xf32>
    %c0_22 = arith.constant 0 : index
    %c0_23 = arith.constant 0 : index
    %45 = vector.load %arg9[%c0_22, %c0_23] : memref<8x1xf32, #tpu.memory_space<vmem>>, vector<8x1xf32>
    tpu.vector_store %arg9[%c0_22, %c0_23], %44 {strides = array<i32>} : memref<8x1xf32, #tpu.memory_space<vmem>>, vector<8x1xf32>,
    return
  }
  func.func @transform_0(%arg0: i32) -> (i32, i32) {
    %c0_i32 = arith.constant 0 : i32
    %c0_i32_0 = arith.constant 0 : i32
    return %arg0, %c0_i32 : i32, i32
  }
  func.func @transform_1(%arg0: i32) -> (i32, i32) {
    %c0_i32 = arith.constant 0 : i32
    %c0_i32_0 = arith.constant 0 : i32
    return %arg0, %c0_i32 : i32, i32
  }
  func.func @transform_2(%arg0: i32) -> (i32, i32) {
    %c0_i32 = arith.constant 0 : i32
    %c0_i32_0 = arith.constant 0 : i32
    %c0_i32_1 = arith.constant 0 : i32
    return %c0_i32, %c0_i32_0 : i32, i32
  }
  func.func @transform_3(%arg0: i32) -> (i32, i32) {
    %c0_i32 = arith.constant 0 : i32
    %c0_i32_0 = arith.constant 0 : i32
    %c0_i32_1 = arith.constant 0 : i32
    return %c0_i32, %c0_i32_0 : i32, i32
  }
  func.func @transform_4(%arg0: i32) -> (i32, i32) {
    %c0_i32 = arith.constant 0 : i32
    %c0_i32_0 = arith.constant 0 : i32
    %c0_i32_1 = arith.constant 0 : i32
    return %c0_i32, %c0_i32_0 : i32, i32
  }
  func.func @transform_5(%arg0: i32) -> (i32, i32) {
    %c0_i32 = arith.constant 0 : i32
    %c0_i32_0 = arith.constant 0 : i32
    %c0_i32_1 = arith.constant 0 : i32
    return %c0_i32, %c0_i32_0 : i32, i32
  }
  func.func @transform_6(%arg0: i32) -> (i32, i32) {
    %c0_i32 = arith.constant 0 : i32
    %c0_i32_0 = arith.constant 0 : i32
    %c0_i32_1 = arith.constant 0 : i32
    return %c0_i32, %c0_i32_0 : i32, i32
  }
  func.func @transform_7(%arg0: i32) -> (i32, i32) {
    %c0_i32 = arith.constant 0 : i32
    %c0_i32_0 = arith.constant 0 : i32
    return %arg0, %c0_i32 : i32, i32
  }
  func.func @transform_8(%arg0: i32) -> (i32, i32) {
    %c0_i32 = arith.constant 0 : i32
    %c0_i32_0 = arith.constant 0 : i32
    return %arg0, %c0_i32 : i32, i32
  }
}

</mosaic_0001>

<llo_original>
// kernel: condflow_forward.1
$region0: #{condflow_forward.1}
  #allocation0 [shape = 'u32[]', space=smem, size = 0x4, offset = 0x4, fixed_abs, tag = 'smem constant byte address 0x4 - core index']
  #allocation1 [shape = 'u32[144,128]{1,0:T(1,128)}', space=vmem, size = 0x12000, scoped, tag = 'internal scratch']
  %s0 = inlined_call_operand.vmem [shape: f32[8,6], index: 0, kind: input, shape index: {}]
  %s1 = inlined_call_operand.vmem [shape: f32[8,4], index: 1, kind: input, shape index: {}]
  %s2 = inlined_call_operand.vmem [shape: f32[3,256], index: 2, kind: input, shape index: {}]
  %s3 = inlined_call_operand.vmem [shape: f32[4,256], index: 3, kind: input, shape index: {}]
  %s4 = inlined_call_operand.vmem [shape: f32[1,256], index: 4, kind: input, shape index: {}]
  %s5 = inlined_call_operand.vmem [shape: f32[256,24], index: 5, kind: input, shape index: {}]
  %s6 = inlined_call_operand.vmem [shape: f32[1,24], index: 6, kind: input, shape index: {}]
  %s7 = inlined_call_operand.hbm [shape: f32[8,6], index: 7, kind: output, shape index: {0}]
  %s8 = inlined_call_operand.vmem [shape: f32[8,1], index: 8, kind: output, shape index: {1}]
  %9 = xla_tuple %s7, %s8
  %s10 = sld [smem:[#allocation0]]
  $region46: #{condflow_forward.1} parent=0
    _
  %s12 = ssub.s32 1, %s10
  %s13 = scalar_select 0, %s12, %s10
  $region1: #{condflow_forward.1} parent=0
    #allocation2 [shape = 'u8[4096]{0}', space=vmem, size = 0x1000, scoped, tag = 'output window, operand 0, single buffered']
    #allocation3 [shape = 's32[1]{0}', space=sflag, size = 0x4, scoped, tag = 'scoped memory for condflow_forward.1']
    %14 = vsyncpa [#allocation3], 0
    // Predicated region
    $region2: #{condflow_forward.1} parent=1 // pred_check
      _
    $region3: #{condflow_forward.1} parent=1 // pred_check_branch
      %16 = sbr.rel (0) target = $region5
    $region4: #{condflow_forward.1} parent=1 // pred_region
      _
    $region5: #{condflow_forward.1} parent=1 // pred_fallthru
      _
    // Predicated region
    $region6: #{condflow_forward.1} parent=1 // pred_check
      _
    $region7: #{condflow_forward.1} parent=1 // pred_check_branch
      %18 = sbr.rel (0) target = $region9
    $region8: #{condflow_forward.1} parent=1 // pred_region
      _
    $region9: #{condflow_forward.1} parent=1 // pred_fallthru
      _
    // Predicated region
    $region10: #{condflow_forward.1} parent=1 // pred_check
      _
    $region11: #{condflow_forward.1} parent=1 // pred_check_branch
      %20 = sbr.rel (0) target = $region13
    $region12: #{condflow_forward.1} parent=1 // pred_region
      _
    $region13: #{condflow_forward.1} parent=1 // pred_fallthru
      _
    // Predicated region
    $region14: #{condflow_forward.1} parent=1 // pred_check
      _
    $region15: #{condflow_forward.1} parent=1 // pred_check_branch
      %22 = sbr.rel (0) target = $region17
    $region16: #{condflow_forward.1} parent=1 // pred_region
      _
    $region17: #{condflow_forward.1} parent=1 // pred_fallthru
      _
    // Predicated region
    $region18: #{condflow_forward.1} parent=1 // pred_check
      _
    $region19: #{condflow_forward.1} parent=1 // pred_check_branch
      %24 = sbr.rel (0) target = $region21
    $region20: #{condflow_forward.1} parent=1 // pred_region
      _
    $region21: #{condflow_forward.1} parent=1 // pred_fallthru
      _
    // Predicated region
    $region22: #{condflow_forward.1} parent=1 // pred_check
      _
    $region23: #{condflow_forward.1} parent=1 // pred_check_branch
      %26 = sbr.rel (0) target = $region25
    $region24: #{condflow_forward.1} parent=1 // pred_region
      _
    $region25: #{condflow_forward.1} parent=1 // pred_fallthru
      _
    // Predicated region
    $region26: #{condflow_forward.1} parent=1 // pred_check
      _
    $region27: #{condflow_forward.1} parent=1 // pred_check_branch
      %28 = sbr.rel (0) target = $region29
    $region28: #{condflow_forward.1} parent=1 // pred_region
      _
    $region29: #{condflow_forward.1} parent=1 // pred_fallthru
      _
    %v29 = vld [vmem:[%s0] sm:$0xff]
    %v30 = vld [vmem:[%s1] sm:$0xff]
    %v31 = vld [vmem:[%s2] sm:$0x77]
    %v32 = vld [vmem:[%s3] sm:$0xff]
    %v34 = vcombine.high %v32, %v32
    %vm35 = vcmask 31744
    %v37 = vsel %vm35, %v30, 0
    %vm39 = vcmask 1043456
    %v40 = vsel %vm39, %v32, 0
    %v42 = vsel %vm39, %v34, 0
    %44 = vmatprep.subr.mxu0 %v42
    %45 = vmatpush1.msra.mxu0 %v40
    %46 = vmatprep.subr.mxu0 0.0
    %47 = vmatpush1.msra.mxu0 0.0
    %48 = vmatprep.subr.mxu0 0.0
    %49 = vmatpush1.msra.mxu0 0.0
    %50 = vmatprep.subr.mxu0 0.0
    %51 = vmatpush1.msra.mxu0 0.0
    %52 = vmatprep.subr.mxu0 0.0
    %53 = vmatpush1.msra.mxu0 0.0
    %54 = vmatprep.subr.mxu0 0.0
    %55 = vmatpush1.msra.mxu0 0.0
    %56 = vmatprep.subr.mxu0 0.0
    %57 = vmatpush1.msra.mxu0 0.0
    %58 = vmatprep.subr.mxu0 0.0
    %59 = vmatpush1.msra.mxu0 0.0
    %60 = vmatprep.subr.mxu0 0.0
    %61 = vmatpush1.msra.mxu0 0.0
    %62 = vmatprep.subr.mxu0 0.0
    %63 = vmatpush1.msra.mxu0 0.0
    %64 = vmatprep.subr.mxu0 0.0
    %65 = vmatpush1.msra.mxu0 0.0
    %66 = vmatprep.subr.mxu0 0.0
    %67 = vmatpush1.msra.mxu0 0.0
    %68 = vmatprep.subr.mxu0 0.0
    %69 = vmatpush1.msra.mxu0 0.0
    %70 = vmatprep.subr.mxu0 0.0
    %71 = vmatpush1.msra.mxu0 0.0
    %72 = vmatprep.subr.mxu0 0.0
    %73 = vmatpush1.msra.mxu0 0.0
    %74 = vmatprep.subr.mxu0 0.0
    %75 = vmatpush1.msra.mxu0 0.0
    %76 = vmatprep.subr.mxu0 0.0
    %77 = vmatpush1.msra.mxu0 0.0
    %78 = vmatprep.subr.mxu0 0.0
    %79 = vmatpush1.msra.mxu0 0.0
    %80 = vmatprep.subr.mxu0 0.0
    %81 = vmatpush1.msra.mxu0 0.0
    %82 = vmatprep.subr.mxu0 0.0
    %83 = vmatpush1.msra.mxu0 0.0
    %84 = vmatprep.subr.mxu0 0.0
    %85 = vmatpush1.msra.mxu0 0.0
    %86 = vmatprep.subr.mxu0 0.0
    %87 = vmatpush1.msra.mxu0 0.0
    %88 = vmatprep.subr.mxu0 0.0
    %89 = vmatpush1.msra.mxu0 0.0
    %90 = vmatprep.subr.mxu0 0.0
    %91 = vmatpush1.msra.mxu0 0.0
    %92 = vmatprep.subr.mxu0 0.0
    %93 = vmatpush1.msra.mxu0 0.0
    %94 = vmatprep.subr.mxu0 0.0
    %95 = vmatpush1.msra.mxu0 0.0
    %96 = vmatprep.subr.mxu0 0.0
    %97 = vmatpush1.msra.mxu0 0.0
    %98 = vmatprep.subr.mxu0 0.0
    %99 = vmatpush1.msra.mxu0 0.0
    %100 = vmatprep.subr.mxu0 0.0
    %101 = vmatpush1.msra.mxu0 0.0
    %102 = vmatprep.subr.mxu0 0.0
    %103 = vmatpush1.msra.mxu0 0.0
    %104 = vmatprep.subr.mxu0 0.0
    %105 = vmatpush1.msra.mxu0 0.0
    %106 = vmatprep.subr.mxu0 0.0
    %107 = vmatpush1.msra.mxu0 0.0
    %108 = vmatprep.mubr.f32.mxu0 0.0
    %109 = vmatmul.mubr.f32.gmra.mrb[0].mxu0 %v37
    %v110 = vpop.f32.mrb[0].mxu0
    %v111 = vadd.f32 0.0, %v110
    %v112 = vpop.f32.mrb[0].mxu0
    %v113 = vadd.f32 0.0, %v112
    %114 = vdwg.mxu0
    %v116 = vcombine.high %v31, %v31
    %vm117 = vcmask 23552
    %v119 = vsel %vm117, %v29, 0
    %vm121 = vcmask 1042432
    %v122 = vsel %vm121, %v31, 0
    %v124 = vsel %vm121, %v116, 0
    %126 = vmatprep.subr.mxu0 %v124
    %127 = vmatpush1.msra.mxu0 %v122
    %128 = vmatprep.subr.mxu0 0.0
    %129 = vmatpush1.msra.mxu0 0.0
    %130 = vmatprep.subr.mxu0 0.0
    %131 = vmatpush1.msra.mxu0 0.0
    %132 = vmatprep.subr.mxu0 0.0
    %133 = vmatpush1.msra.mxu0 0.0
    %134 = vmatprep.subr.mxu0 0.0
    %135 = vmatpush1.msra.mxu0 0.0
    %136 = vmatprep.subr.mxu0 0.0
    %137 = vmatpush1.msra.mxu0 0.0
    %138 = vmatprep.subr.mxu0 0.0
    %139 = vmatpush1.msra.mxu0 0.0
    %140 = vmatprep.subr.mxu0 0.0
    %141 = vmatpush1.msra.mxu0 0.0
    %142 = vmatprep.subr.mxu0 0.0
    %143 = vmatpush1.msra.mxu0 0.0
    %144 = vmatprep.subr.mxu0 0.0
    %145 = vmatpush1.msra.mxu0 0.0
    %146 = vmatprep.subr.mxu0 0.0
    %147 = vmatpush1.msra.mxu0 0.0
    %148 = vmatprep.subr.mxu0 0.0
    %149 = vmatpush1.msra.mxu0 0.0
    %150 = vmatprep.subr.mxu0 0.0
    %151 = vmatpush1.msra.mxu0 0.0
    %152 = vmatprep.subr.mxu0 0.0
    %153 = vmatpush1.msra.mxu0 0.0
    %154 = vmatprep.subr.mxu0 0.0
    %155 = vmatpush1.msra.mxu0 0.0
    %156 = vmatprep.subr.mxu0 0.0
    %157 = vmatpush1.msra.mxu0 0.0
    %158 = vmatprep.subr.mxu0 0.0
    %159 = vmatpush1.msra.mxu0 0.0
    %160 = vmatprep.subr.mxu0 0.0
    %161 = vmatpush1.msra.mxu0 0.0
    %162 = vmatprep.subr.mxu0 0.0
    %163 = vmatpush1.msra.mxu0 0.0
    %164 = vmatprep.subr.mxu0 0.0
    %165 = vmatpush1.msra.mxu0 0.0
    %166 = vmatprep.subr.mxu0 0.0
    %167 = vmatpush1.msra.mxu0 0.0
    %168 = vmatprep.subr.mxu0 0.0
    %169 = vmatpush1.msra.mxu0 0.0
    %170 = vmatprep.subr.mxu0 0.0
    %171 = vmatpush1.msra.mxu0 0.0
    %172 = vmatprep.subr.mxu0 0.0
    %173 = vmatpush1.msra.mxu0 0.0
    %174 = vmatprep.subr.mxu0 0.0
    %175 = vmatpush1.msra.mxu0 0.0
    %176 = vmatprep.subr.mxu0 0.0
    %177 = vmatpush1.msra.mxu0 0.0
    %178 = vmatprep.subr.mxu0 0.0
    %179 = vmatpush1.msra.mxu0 0.0
    %180 = vmatprep.subr.mxu0 0.0
    %181 = vmatpush1.msra.mxu0 0.0
    %182 = vmatprep.subr.mxu0 0.0
    %183 = vmatpush1.msra.mxu0 0.0
    %184 = vmatprep.subr.mxu0 0.0
    %185 = vmatpush1.msra.mxu0 0.0
    %186 = vmatprep.subr.mxu0 0.0
    %187 = vmatpush1.msra.mxu0 0.0
    %188 = vmatprep.subr.mxu0 0.0
    %189 = vmatpush1.msra.mxu0 0.0
    %190 = vmatprep.mubr.f32.mxu0 0.0
    %191 = vmatmul.mubr.f32.gmra.mrb[0].mxu0 %v119
    %v192 = vpop.f32.mrb[0].mxu0
    %v193 = vadd.f32 %v111, %v192
    %v194 = vpop.f32.mrb[0].mxu0
    %v195 = vadd.f32 %v113, %v194
    %196 = vdwg.mxu0
    %v197 = vld [vmem:[%s4] sm:$0x3]
    %v199 = vlaneseq
    %v200 = vshrl.u32 %v199, 7
    %v201 = vsub.s32 0, %v200
    %v202 = vrot.slane %v197, %v201
    %v203 = vlaneseq
    %v204 = vshrl.u32 %v203, 7
    %v205 = vsub.s32 1, %v204
    %v206 = vrot.slane %v197, %v205
    %v209 = vadd.f32 %v193, %v202
    %v210 = vadd.f32 %v195, %v206
    %v211 = vmax.f32 %v209, 0.0
    %v212 = vmax.f32 %v210, 0.0
    %v213 = vld [vmem:[%s5] sm:$0xff]
    %v214 = vld [vmem:[%s5 + $0x8] sm:$0xff]
    %v215 = vld [vmem:[%s5 + $0x10] sm:$0xff]
    %v216 = vld [vmem:[%s5 + $0x18] sm:$0xff]
    %v217 = vld [vmem:[%s5 + $0x20] sm:$0xff]
    %v218 = vld [vmem:[%s5 + $0x28] sm:$0xff]
    %v219 = vld [vmem:[%s5 + $0x30] sm:$0xff]
    %v220 = vld [vmem:[%s5 + $0x38] sm:$0xff]
    %v221 = vld [vmem:[%s5 + $0x40] sm:$0xff]
    %v222 = vld [vmem:[%s5 + $0x48] sm:$0xff]
    %v223 = vld [vmem:[%s5 + $0x50] sm:$0xff]
    %v224 = vld [vmem:[%s5 + $0x58] sm:$0xff]
    %v225 = vld [vmem:[%s5 + $0x60] sm:$0xff]
    %v226 = vld [vmem:[%s5 + $0x68] sm:$0xff]
    %v227 = vld [vmem:[%s5 + $0x70] sm:$0xff]
    %v228 = vld [vmem:[%s5 + $0x78] sm:$0xff]
    %v229 = vld [vmem:[%s5 + $0x80] sm:$0xff]
    %v230 = vld [vmem:[%s5 + $0x88] sm:$0xff]
    %v231 = vld [vmem:[%s5 + $0x90] sm:$0xff]
    %v232 = vld [vmem:[%s5 + $0x98] sm:$0xff]
    %v233 = vld [vmem:[%s5 + $0xa0] sm:$0xff]
    %v234 = vld [vmem:[%s5 + $0xa8] sm:$0xff]
    %v235 = vld [vmem:[%s5 + $0xb0] sm:$0xff]
    %v236 = vld [vmem:[%s5 + $0xb8] sm:$0xff]
    %v237 = vld [vmem:[%s5 + $0xc0] sm:$0xff]
    %v238 = vld [vmem:[%s5 + $0xc8] sm:$0xff]
    %v239 = vld [vmem:[%s5 + $0xd0] sm:$0xff]
    %v240 = vld [vmem:[%s5 + $0xd8] sm:$0xff]
    %v241 = vld [vmem:[%s5 + $0xe0] sm:$0xff]
    %v242 = vld [vmem:[%s5 + $0xe8] sm:$0xff]
    %v243 = vld [vmem:[%s5 + $0xf0] sm:$0xff]
    %v244 = vld [vmem:[%s5 + $0xf8] sm:$0xff]
    %v245 = vld [vmem:[%s6] sm:$0x1]
    %v247 = vlaneseq
    %v248 = vshrl.u32 %v247, 7
    %v249 = vsub.s32 0, %v248
    %v250 = vrot.slane %v245, %v249
    %252 = vmatprep.subr.mxu0 0.0
    %253 = vmatpush1.msra.mxu0 %v213
    %254 = vmatprep.subr.mxu0 0.0
    %255 = vmatpush1.msra.mxu0 %v214
    %256 = vmatprep.subr.mxu0 0.0
    %257 = vmatpush1.msra.mxu0 %v215
    %258 = vmatprep.subr.mxu0 0.0
    %259 = vmatpush1.msra.mxu0 %v216
    %260 = vmatprep.subr.mxu0 0.0
    %261 = vmatpush1.msra.mxu0 %v217
    %262 = vmatprep.subr.mxu0 0.0
    %263 = vmatpush1.msra.mxu0 %v218
    %264 = vmatprep.subr.mxu0 0.0
    %265 = vmatpush1.msra.mxu0 %v219
    %266 = vmatprep.subr.mxu0 0.0
    %267 = vmatpush1.msra.mxu0 %v220
    %268 = vmatprep.subr.mxu0 0.0
    %269 = vmatpush1.msra.mxu0 %v221
    %270 = vmatprep.subr.mxu0 0.0
    %271 = vmatpush1.msra.mxu0 %v222
    %272 = vmatprep.subr.mxu0 0.0
    %273 = vmatpush1.msra.mxu0 %v223
    %274 = vmatprep.subr.mxu0 0.0
    %275 = vmatpush1.msra.mxu0 %v224
    %276 = vmatprep.subr.mxu0 0.0
    %277 = vmatpush1.msra.mxu0 %v225
    %278 = vmatprep.subr.mxu0 0.0
    %279 = vmatpush1.msra.mxu0 %v226
    %280 = vmatprep.subr.mxu0 0.0
    %281 = vmatpush1.msra.mxu0 %v227
    %282 = vmatprep.subr.mxu0 0.0
    %283 = vmatpush1.msra.mxu0 %v228
    %284 = vmatprep.subr.mxu0 0.0
    %285 = vmatpush1.msra.mxu0 %v229
    %286 = vmatprep.subr.mxu0 0.0
    %287 = vmatpush1.msra.mxu0 %v230
    %288 = vmatprep.subr.mxu0 0.0
    %289 = vmatpush1.msra.mxu0 %v231
    %290 = vmatprep.subr.mxu0 0.0
    %291 = vmatpush1.msra.mxu0 %v232
    %292 = vmatprep.subr.mxu0 0.0
    %293 = vmatpush1.msra.mxu0 %v233
    %294 = vmatprep.subr.mxu0 0.0
    %295 = vmatpush1.msra.mxu0 %v234
    %296 = vmatprep.subr.mxu0 0.0
    %297 = vmatpush1.msra.mxu0 %v235
    %298 = vmatprep.subr.mxu0 0.0
    %299 = vmatpush1.msra.mxu0 %v236
    %300 = vmatprep.subr.mxu0 0.0
    %301 = vmatpush1.msra.mxu0 %v237
    %302 = vmatprep.subr.mxu0 0.0
    %303 = vmatpush1.msra.mxu0 %v238
    %304 = vmatprep.subr.mxu0 0.0
    %305 = vmatpush1.msra.mxu0 %v239
    %306 = vmatprep.subr.mxu0 0.0
    %307 = vmatpush1.msra.mxu0 %v240
    %308 = vmatprep.subr.mxu0 0.0
    %309 = vmatpush1.msra.mxu0 %v241
    %310 = vmatprep.subr.mxu0 0.0
    %311 = vmatpush1.msra.mxu0 %v242
    %312 = vmatprep.subr.mxu0 0.0
    %313 = vmatpush1.msra.mxu0 %v243
    %314 = vmatprep.subr.mxu0 0.0
    %315 = vmatpush1.msra.mxu0 %v244
    %316 = vmatprep.mubr.f32.mxu0 %v212
    %317 = vmatmul.mubr.f32.gmra.mrb[0].mxu0 %v211
    %v318 = vpop.f32.mrb[0].mxu0
    %v319 = vadd.f32 %v250, %v318
    %v320 = vpop.f32.mrb[0].mxu0
    %321 = vdwg.mxu0
    %v322 = vtanh.pop %v319
    %v323 = vmul.f32 %v322, 1.442695
    %v324 = vpow.pop %v323
    %326 = vrot.lane.b32.xlu0 %v324, 3
    %v327 = vpop.permute.xlu0 %326
    %v329 = vmul.f32 %v29, %v327
    %331 = vrot.lane.b32.xlu0 %v319, 119
    %v332 = vpop.permute.xlu0 %331
    %v334 = vadd.f32 %v329, %v332
    %v335 = vmul.f32 %v334, %v324
    %336 = vrot.lane.b32.xlu0 %v319, 116
    %v337 = vpop.permute.xlu0 %336
    %v339 = vadd.f32 %v335, %v337
    %340 = vrot.lane.b32.xlu0 %v324, 125
    %v341 = vpop.permute.xlu0 %340
    %v343 = vmul.f32 %v339, %v341
    %344 = vrot.lane.b32.xlu0 %v319, 113
    %v345 = vpop.permute.xlu0 %344
    %v347 = vadd.f32 %v343, %v345
    %348 = vrot.lane.b32.xlu0 %v324, 122
    %v349 = vpop.permute.xlu0 %348
    %v351 = vmul.f32 %v347, %v349
    %352 = vrot.lane.b32.xlu0 %v319, 110
    %v353 = vpop.permute.xlu0 %352
    %v355 = vadd.f32 %v351, %v353
    %356 = vst.msk [vmem:[#allocation2] sm:$0xff] %vm117, %v29
    %vm357 = vcmask 48152
    %358 = vst.msk [vmem:[#allocation2] sm:$0xff] %vm357, %v355
    %vm359 = vcmask 97280
    %v360 = vsel %vm359, %v322, 0.0
    %361 = vadd.xlane.f32.xlu0 %v360
    %v362 = vpop.xlane.xlu0 %361
    %vm363 = vcmask 7168
    %364 = vst.msk [vmem:[%s8] sm:$0xff] %vm363, %v362
    // Predicated region
    $region30: #{condflow_forward.1} parent=1 // pred_check
      _
    $region31: #{condflow_forward.1} parent=1 // pred_check_branch
      %366 = sbr.rel (0) target = $region33
    $region32: #{condflow_forward.1} parent=1 // pred_region
      %s368 = ssub.s32 128, 128
      %369 = vsyncadd [#allocation3], %s368
      %s371 = sshll.u32 [#allocation2], 4
      %s372 = int_to_ptr.vmem [resolvable:$true] %s371
      %374 = dma.vmem_to_hbm [thread:$0]  %s372, 128, %s7, [#allocation3]
    $region33: #{condflow_forward.1} parent=1 // pred_fallthru
      _
    // Predicated region
    $region34: #{condflow_forward.1} parent=1 // pred_check
      _
    $region35: #{condflow_forward.1} parent=1 // pred_check_branch
      %376 = sbr.rel (0) target = $region37
    $region36: #{condflow_forward.1} parent=1 // pred_region
      _
    $region37: #{condflow_forward.1} parent=1 // pred_fallthru
      _
    // Predicated region
    $region38: #{condflow_forward.1} parent=1 // pred_check
      _
    $region39: #{condflow_forward.1} parent=1 // pred_check_branch
      %378 = sbr.rel (0) target = $region41
    $region40: #{condflow_forward.1} parent=1 // pred_region
      %379 = dma.done [#allocation3], 128
    $region41: #{condflow_forward.1} parent=1 // pred_fallthru
      _
    // Predicated region
    $region42: #{condflow_forward.1} parent=1 // pred_check
      _
    $region43: #{condflow_forward.1} parent=1 // pred_check_branch
      %381 = sbr.rel (0) target = $region45
    $region44: #{condflow_forward.1} parent=1 // pred_region
      _
    $region45: #{condflow_forward.1} parent=1 // pred_fallthru
      _
    %382 = vsyncpa [#allocation3], 1

</llo_original>
